<compile_context>
chip_gen: v7x
topology: tpu7x:2x2x1
jax: 0.10.0
libtpu: 0.0.40
codegen_flags: <defaults>
</compile_context>

<pallas_src>
import functools
import math

import jax
import jax.numpy as jnp
from jax.experimental import pallas as pl
from jax.experimental.pallas import tpu as pltpu


def _gelu_exact_f32(x):
    """Exact (erf) GELU in f32 using A&S 7.1.26 erf approximation (<=1.5e-7 abs err)."""
    z = x * 0.7071067811865476  # x / sqrt(2)
    a = jnp.abs(z)
    t = 1.0 / (1.0 + 0.3275911 * a)
    poly = t * (0.254829592
                + t * (-0.284496736
                       + t * (1.421413741
                              + t * (-1.453152027 + t * 1.061405429))))
    erf_abs = 1.0 - poly * jnp.exp(-a * a)
    erf = jnp.where(z >= 0.0, erf_abs, -erf_abs)
    return 0.5 * x * (1.0 + erf)


def _mlp_kernel(x_ref, w1_ref, b1_ref, w2_ref, b2_ref, o_ref):
    # x_ref : (tm, Din)   w1_ref: (Din, H)   b1_ref: (1, H)
    # w2_ref: (H, Dout)   b2_ref: (1, Dout)  o_ref : (tm, Dout)
    x = x_ref[...]

    # fc1 (MXU, f32 accumulation) + bias
    h = jnp.dot(x, w1_ref[...], preferred_element_type=jnp.float32)
    h = h + b1_ref[...].astype(jnp.float32)

    # exact GELU in f32 (VPU + EUP exp)
    h = _gelu_exact_f32(h)

    # TODO(synk): dropout is identity here (p=0.0 / eval); a training-mode
    # dropout would use pltpu.prng_seed + pltpu.stateful_bernoulli.

    # fc2 (MXU) + bias
    y = jnp.dot(h.astype(w2_ref.dtype), w2_ref[...],
                preferred_element_type=jnp.float32)
    y = y + b2_ref[...].astype(jnp.float32)

    o_ref[...] = y.astype(o_ref.dtype)


def mlp(x, w1, b1, w2, b2, *, block_m=256):
    """x: (..., Din); w1: (Din, H); b1: (H,); w2: (H, Dout); b2: (Dout,).

    Returns (..., Dout). Weights are stored (in, out) = PyTorch nn.Linear W.T.
    """
    *lead, din = x.shape
    H = w1.shape[1]
    dout = w2.shape[1]
    M = int(math.prod(lead)) if lead else 1
    x2 = x.reshape(M, din)

    # Token-tile: multiple of 8 (sublane); single block for small M.
    bm = min(block_m, ((M + 7) // 8) * 8)
    Mp = ((M + bm - 1) // bm) * bm
    if Mp != M:
        x2 = jnp.pad(x2, ((0, Mp - M), (0, 0)))

    b1_2d = b1.reshape(1, H)
    b2_2d = b2.reshape(1, dout)

    itemsize = jnp.dtype(x.dtype).itemsize
    cost = pl.CostEstimate(
        flops=2 * Mp * (din * H + H * dout),
        transcendentals=Mp * H,
        bytes_accessed=(Mp * din + din * H + H + H * dout + dout + Mp * dout)
        * itemsize,
    )

    out = pl.pallas_call(
        _mlp_kernel,
        out_shape=jax.ShapeDtypeStruct((Mp, dout), x.dtype),
        grid=(Mp // bm,),
        in_specs=[
            pl.BlockSpec((bm, din), lambda i: (i, 0)),     # x tile
            pl.BlockSpec((din, H), lambda i: (0, 0)),      # W1 (resident)
            pl.BlockSpec((1, H), lambda i: (0, 0)),        # b1 (resident)
            pl.BlockSpec((H, dout), lambda i: (0, 0)),     # W2 (resident)
            pl.BlockSpec((1, dout), lambda i: (0, 0)),     # b2 (resident)
        ],
        out_specs=pl.BlockSpec((bm, dout), lambda i: (i, 0)),
        compiler_params=pltpu.CompilerParams(
            dimension_semantics=("parallel",),
        ),
        cost_estimate=cost,
    )(x2, w1, b1_2d, w2, b2_2d)

    if Mp != M:
        out = out[:M]
    return out.reshape(*lead, dout)


def _mlp_ref(x, w1, b1, w2, b2):
    """Pure-JAX reference mirroring the PyTorch forward (exact GELU, no dropout)."""
    h = jnp.dot(x, w1) + b1
    h = jax.nn.gelu(h, approximate=False)
    return jnp.dot(h, w2) + b2


if __name__ == "__main__":
    key = jax.random.PRNGKey(0)
    k1, k2, k3, k4, k5 = jax.random.split(key, 5)

    # batch=2, seq=8, in_features=16, hidden_features=32, out_features=16
    B, S, DIN, HID, DOUT = 2, 8, 16, 32, 16
    x = jax.random.normal(k1, (B, S, DIN), dtype=jnp.float32)
    w1 = jax.random.normal(k2, (DIN, HID), dtype=jnp.float32) / jnp.sqrt(DIN)
    b1 = 0.1 * jax.random.normal(k3, (HID,), dtype=jnp.float32)
    w2 = jax.random.normal(k4, (HID, DOUT), dtype=jnp.float32) / jnp.sqrt(HID)
    b2 = 0.1 * jax.random.normal(k5, (DOUT,), dtype=jnp.float32)

    out = mlp(x, w1, b1, w2, b2)
    out = jax.block_until_ready(out)

    ref = _mlp_ref(x, w1, b1, w2, b2)
    assert out.shape == (B, S, DOUT), out.shape
    assert jnp.allclose(out, ref, atol=1e-4, rtol=1e-4), (
        float(jnp.max(jnp.abs(out - ref)))
    )

    print("KERNEL_OK")
</pallas_src>

<mosaic_0001>
module attributes {stable_mosaic.version = 11 : i64} {
  func.func @_mlp_kernel(%arg0: i32, %arg1: memref<16x16xf32, #tpu.memory_space<vmem>>, %arg2: memref<16x32xf32, #tpu.memory_space<vmem>>, %arg3: memref<1x32xf32, #tpu.memory_space<vmem>>, %arg4: memref<32x16xf32, #tpu.memory_space<vmem>>, %arg5: memref<1x16xf32, #tpu.memory_space<vmem>>, %arg6: memref<16x16xf32, #tpu.memory_space<vmem>>) attributes {dimension_semantics = [#tpu.dimension_semantics<parallel>], iteration_bounds = array<i64: 1>, scalar_prefetch = 0 : i64, scratch_operands = 0 : i64, tpu.core_type = #tpu.core_type<tc>, window_params = [{transform_indices = @transform_0, window_bounds = array<i64: 16, 16>}, {pipeline_mode = #tpu.pipeline_mode<synchronous>, transform_indices = @transform_1, window_bounds = array<i64: 16, 32>}, {pipeline_mode = #tpu.pipeline_mode<synchronous>, transform_indices = @transform_2, window_bounds = array<i64: 1, 32>}, {pipeline_mode = #tpu.pipeline_mode<synchronous>, transform_indices = @transform_3, window_bounds = array<i64: 32, 16>}, {pipeline_mode = #tpu.pipeline_mode<synchronous>, transform_indices = @transform_4, window_bounds = array<i64: 1, 16>}, {transform_indices = @transform_5, window_bounds = array<i64: 16, 16>}]} {
    %c0 = arith.constant 0 : index
    %c0_0 = arith.constant 0 : index
    %0 = vector.load %arg1[%c0, %c0_0] : memref<16x16xf32, #tpu.memory_space<vmem>>, vector<16x16xf32>
    %c0_1 = arith.constant 0 : index
    %c0_2 = arith.constant 0 : index
    %1 = vector.load %arg2[%c0_1, %c0_2] : memref<16x32xf32, #tpu.memory_space<vmem>>, vector<16x32xf32>
    %cst = arith.constant dense<0.000000e+00> : vector<16x32xf32>
    %2 = tpu.matmul %0, %1, %cst {dimension_numbers = #tpu.dot_dimension_numbers<[1], [0], [0], [1], [0, 0, 1, 1], [], []>} : vector<16x16xf32>, vector<16x32xf32>, vector<16x32xf32> -> vector<16x32xf32>
    %c0_3 = arith.constant 0 : index
    %c0_4 = arith.constant 0 : index
    %3 = vector.load %arg3[%c0_3, %c0_4] : memref<1x32xf32, #tpu.memory_space<vmem>>, vector<1x32xf32>
    %4 = vector.broadcast %3 : vector<1x32xf32> to vector<16x32xf32>
    %5 = arith.addf %2, %4 : vector<16x32xf32>
    %cst_5 = arith.constant 0.707106769 : f32
    %6 = vector.broadcast %cst_5 : f32 to vector<16x32xf32>
    %7 = arith.mulf %5, %6 : vector<16x32xf32>
    %8 = math.absf %7 : vector<16x32xf32>
    %cst_6 = arith.constant 0.327591091 : f32
    %9 = vector.broadcast %cst_6 : f32 to vector<16x32xf32>
    %10 = arith.mulf %9, %8 : vector<16x32xf32>
    %cst_7 = arith.constant 1.000000e+00 : f32
    %11 = vector.broadcast %cst_7 : f32 to vector<16x32xf32>
    %12 = arith.addf %11, %10 : vector<16x32xf32>
    %cst_8 = arith.constant 1.000000e+00 : f32
    %13 = vector.broadcast %cst_8 : f32 to vector<16x32xf32>
    %14 = arith.divf %13, %12 : vector<16x32xf32>
    %cst_9 = arith.constant 1.06140542 : f32
    %15 = vector.broadcast %cst_9 : f32 to vector<16x32xf32>
    %16 = arith.mulf %14, %15 : vector<16x32xf32>
    %cst_10 = arith.constant -1.45315206 : f32
    %17 = vector.broadcast %cst_10 : f32 to vector<16x32xf32>
    %18 = arith.addf %17, %16 : vector<16x32xf32>
    %19 = arith.mulf %14, %18 : vector<16x32xf32>
    %cst_11 = arith.constant 1.42141378 : f32
    %20 = vector.broadcast %cst_11 : f32 to vector<16x32xf32>
    %21 = arith.addf %20, %19 : vector<16x32xf32>
    %22 = arith.mulf %14, %21 : vector<16x32xf32>
    %cst_12 = arith.constant -0.284496725 : f32
    %23 = vector.broadcast %cst_12 : f32 to vector<16x32xf32>
    %24 = arith.addf %23, %22 : vector<16x32xf32>
    %25 = arith.mulf %14, %24 : vector<16x32xf32>
    %cst_13 = arith.constant 0.254829586 : f32
    %26 = vector.broadcast %cst_13 : f32 to vector<16x32xf32>
    %27 = arith.addf %26, %25 : vector<16x32xf32>
    %28 = arith.mulf %14, %27 : vector<16x32xf32>
    %cst_14 = arith.constant 0.000000e+00 : f32
    %29 = vector.broadcast %cst_14 : f32 to vector<16x32xf32>
    %30 = arith.subf %29, %8 : vector<16x32xf32>
    %31 = arith.mulf %30, %8 : vector<16x32xf32>
    %32 = math.exp %31 : vector<16x32xf32>
    %33 = arith.mulf %28, %32 : vector<16x32xf32>
    %cst_15 = arith.constant 1.000000e+00 : f32
    %34 = vector.broadcast %cst_15 : f32 to vector<16x32xf32>
    %35 = arith.subf %34, %33 : vector<16x32xf32>
    %cst_16 = arith.constant 0.000000e+00 : f32
    %36 = vector.broadcast %cst_16 : f32 to vector<16x32xf32>
    %37 = arith.cmpf oge, %7, %36 : vector<16x32xf32>
    %cst_17 = arith.constant 0.000000e+00 : f32
    %38 = vector.broadcast %cst_17 : f32 to vector<16x32xf32>
    %39 = arith.subf %38, %35 : vector<16x32xf32>
    %40 = arith.select %37, %35, %39 : vector<16x32xi1>, vector<16x32xf32>
    %cst_18 = arith.constant 5.000000e-01 : f32
    %41 = vector.broadcast %cst_18 : f32 to vector<16x32xf32>
    %42 = arith.mulf %41, %5 : vector<16x32xf32>
    %cst_19 = arith.constant 1.000000e+00 : f32
    %43 = vector.broadcast %cst_19 : f32 to vector<16x32xf32>
    %44 = arith.addf %43, %40 : vector<16x32xf32>
    %45 = arith.mulf %42, %44 : vector<16x32xf32>
    %c0_20 = arith.constant 0 : index
    %c0_21 = arith.constant 0 : index
    %46 = vector.load %arg4[%c0_20, %c0_21] : memref<32x16xf32, #tpu.memory_space<vmem>>, vector<32x16xf32>
    %cst_22 = arith.constant dense<0.000000e+00> : vector<16x16xf32>
    %47 = tpu.matmul %45, %46, %cst_22 {dimension_numbers = #tpu.dot_dimension_numbers<[1], [0], [0], [1], [0, 0, 1, 1], [], []>} : vector<16x32xf32>, vector<32x16xf32>, vector<16x16xf32> -> vector<16x16xf32>
    %c0_23 = arith.constant 0 : index
    %c0_24 = arith.constant 0 : index
    %48 = vector.load %arg5[%c0_23, %c0_24] : memref<1x16xf32, #tpu.memory_space<vmem>>, vector<1x16xf32>
    %49 = vector.broadcast %48 : vector<1x16xf32> to vector<16x16xf32>
    %50 = arith.addf %47, %49 : vector<16x16xf32>
    %c0_25 = arith.constant 0 : index
    %c0_26 = arith.constant 0 : index
    %51 = vector.load %arg6[%c0_25, %c0_26] : memref<16x16xf32, #tpu.memory_space<vmem>>, vector<16x16xf32>
    tpu.vector_store %arg6[%c0_25, %c0_26], %50 {strides = array<i32>} : memref<16x16xf32, #tpu.memory_space<vmem>>, vector<16x16xf32>,
    return
  }
  func.func @transform_0(%arg0: i32) -> (i32, i32) {
    %c0_i32 = arith.constant 0 : i32
    %c0_i32_0 = arith.constant 0 : i32
    return %arg0, %c0_i32 : i32, i32
  }
  func.func @transform_1(%arg0: i32) -> (i32, i32) {
    %c0_i32 = arith.constant 0 : i32
    %c0_i32_0 = arith.constant 0 : i32
    %c0_i32_1 = arith.constant 0 : i32
    return %c0_i32, %c0_i32_0 : i32, i32
  }
  func.func @transform_2(%arg0: i32) -> (i32, i32) {
    %c0_i32 = arith.constant 0 : i32
    %c0_i32_0 = arith.constant 0 : i32
    %c0_i32_1 = arith.constant 0 : i32
    return %c0_i32, %c0_i32_0 : i32, i32
  }
  func.func @transform_3(%arg0: i32) -> (i32, i32) {
    %c0_i32 = arith.constant 0 : i32
    %c0_i32_0 = arith.constant 0 : i32
    %c0_i32_1 = arith.constant 0 : i32
    return %c0_i32, %c0_i32_0 : i32, i32
  }
  func.func @transform_4(%arg0: i32) -> (i32, i32) {
    %c0_i32 = arith.constant 0 : i32
    %c0_i32_0 = arith.constant 0 : i32
    %c0_i32_1 = arith.constant 0 : i32
    return %c0_i32, %c0_i32_0 : i32, i32
  }
  func.func @transform_5(%arg0: i32) -> (i32, i32) {
    %c0_i32 = arith.constant 0 : i32
    %c0_i32_0 = arith.constant 0 : i32
    return %arg0, %c0_i32 : i32, i32
  }
}

</mosaic_0001>

<llo_original>
// kernel: tpu_custom_call.1
$region0: #{tpu_custom_call.1}
  #allocation0 [shape = 'u32[]', space=smem, size = 0x4, offset = 0x4, fixed_abs, tag = 'smem constant byte address 0x4 - core index']
  #allocation1 [shape = 'u32[144,128]{1,0:T(1,128)}', space=vmem, size = 0x12000, scoped, tag = 'internal scratch']
  %s0 = inlined_call_operand.vmem [shape: f32[16,16], index: 0, kind: input, shape index: {}]
  %s1 = inlined_call_operand.vmem [shape: f32[16,32], index: 1, kind: input, shape index: {}]
  %s2 = inlined_call_operand.vmem [shape: f32[1,32], index: 2, kind: input, shape index: {}]
  %s3 = inlined_call_operand.vmem [shape: f32[32,16], index: 3, kind: input, shape index: {}]
  %s4 = inlined_call_operand.vmem [shape: f32[1,16], index: 4, kind: input, shape index: {}]
  %s5 = inlined_call_operand.hbm [shape: f32[16,16], index: 5, kind: output, shape index: {}]
  %s6 = sld [smem:[#allocation0]]
  $region30: #{tpu_custom_call.1} parent=0
    _
  %s8 = ssub.s32 1, %s6
  %s9 = scalar_select 0, %s8, %s6
  $region1: #{tpu_custom_call.1} parent=0
    #allocation2 [shape = 'u8[8192]{0}', space=vmem, size = 0x2000, scoped, tag = 'output window, operand 0, single buffered']
    #allocation3 [shape = 's32[1]{0}', space=sflag, size = 0x4, scoped, tag = 'scoped memory for tpu_custom_call.1']
    %10 = vsyncpa [#allocation3], 0
    // Predicated region
    $region2: #{tpu_custom_call.1} parent=1 // pred_check
      _
    $region3: #{tpu_custom_call.1} parent=1 // pred_check_branch
      %12 = sbr.rel (0) target = $region5
    $region4: #{tpu_custom_call.1} parent=1 // pred_region
      _
    $region5: #{tpu_custom_call.1} parent=1 // pred_fallthru
      _
    // Predicated region
    $region6: #{tpu_custom_call.1} parent=1 // pred_check
      _
    $region7: #{tpu_custom_call.1} parent=1 // pred_check_branch
      %14 = sbr.rel (0) target = $region9
    $region8: #{tpu_custom_call.1} parent=1 // pred_region
      _
    $region9: #{tpu_custom_call.1} parent=1 // pred_fallthru
      _
    // Predicated region
    $region10: #{tpu_custom_call.1} parent=1 // pred_check
      _
    $region11: #{tpu_custom_call.1} parent=1 // pred_check_branch
      %16 = sbr.rel (0) target = $region13
    $region12: #{tpu_custom_call.1} parent=1 // pred_region
      _
    $region13: #{tpu_custom_call.1} parent=1 // pred_fallthru
      _
    // Predicated region
    $region14: #{tpu_custom_call.1} parent=1 // pred_check
      _
    $region15: #{tpu_custom_call.1} parent=1 // pred_check_branch
      %18 = sbr.rel (0) target = $region17
    $region16: #{tpu_custom_call.1} parent=1 // pred_region
      _
    $region17: #{tpu_custom_call.1} parent=1 // pred_fallthru
      _
    // Predicated region
    $region18: #{tpu_custom_call.1} parent=1 // pred_check
      _
    $region19: #{tpu_custom_call.1} parent=1 // pred_check_branch
      %20 = sbr.rel (0) target = $region21
    $region20: #{tpu_custom_call.1} parent=1 // pred_region
      _
    $region21: #{tpu_custom_call.1} parent=1 // pred_fallthru
      _
    %v21 = vld [vmem:[%s0] sm:$0xff]
    %v22 = vld [vmem:[%s0 + $0x8] sm:$0xff]
    %v23 = vld [vmem:[%s1] sm:$0xff]
    %v24 = vld [vmem:[%s1 + $0x8] sm:$0xff]
    %v25 = vld [vmem:[%s2] sm:$0x1]
    %v27 = vlaneseq
    %v28 = vshrl.u32 %v27, 7
    %v29 = vsub.s32 0, %v28
    %v30 = vrot.slane %v25, %v29
    %vm32 = vcmask 130048
    %v34 = vsel %vm32, %v21, 0
    %v37 = vsel %vm32, %v22, 0
    %39 = vmatprep.subr.mxu0 0.0
    %40 = vmatpush1.msra.mxu0 %v23
    %41 = vmatprep.subr.mxu0 0.0
    %42 = vmatpush1.msra.mxu0 %v24
    %43 = vmatprep.subr.mxu0 0.0
    %44 = vmatpush1.msra.mxu0 0.0
    %45 = vmatprep.subr.mxu0 0.0
    %46 = vmatpush1.msra.mxu0 0.0
    %47 = vmatprep.subr.mxu0 0.0
    %48 = vmatpush1.msra.mxu0 0.0
    %49 = vmatprep.subr.mxu0 0.0
    %50 = vmatpush1.msra.mxu0 0.0
    %51 = vmatprep.subr.mxu0 0.0
    %52 = vmatpush1.msra.mxu0 0.0
    %53 = vmatprep.subr.mxu0 0.0
    %54 = vmatpush1.msra.mxu0 0.0
    %55 = vmatprep.subr.mxu0 0.0
    %56 = vmatpush1.msra.mxu0 0.0
    %57 = vmatprep.subr.mxu0 0.0
    %58 = vmatpush1.msra.mxu0 0.0
    %59 = vmatprep.subr.mxu0 0.0
    %60 = vmatpush1.msra.mxu0 0.0
    %61 = vmatprep.subr.mxu0 0.0
    %62 = vmatpush1.msra.mxu0 0.0
    %63 = vmatprep.subr.mxu0 0.0
    %64 = vmatpush1.msra.mxu0 0.0
    %65 = vmatprep.subr.mxu0 0.0
    %66 = vmatpush1.msra.mxu0 0.0
    %67 = vmatprep.subr.mxu0 0.0
    %68 = vmatpush1.msra.mxu0 0.0
    %69 = vmatprep.subr.mxu0 0.0
    %70 = vmatpush1.msra.mxu0 0.0
    %71 = vmatprep.subr.mxu0 0.0
    %72 = vmatpush1.msra.mxu0 0.0
    %73 = vmatprep.subr.mxu0 0.0
    %74 = vmatpush1.msra.mxu0 0.0
    %75 = vmatprep.subr.mxu0 0.0
    %76 = vmatpush1.msra.mxu0 0.0
    %77 = vmatprep.subr.mxu0 0.0
    %78 = vmatpush1.msra.mxu0 0.0
    %79 = vmatprep.subr.mxu0 0.0
    %80 = vmatpush1.msra.mxu0 0.0
    %81 = vmatprep.subr.mxu0 0.0
    %82 = vmatpush1.msra.mxu0 0.0
    %83 = vmatprep.subr.mxu0 0.0
    %84 = vmatpush1.msra.mxu0 0.0
    %85 = vmatprep.subr.mxu0 0.0
    %86 = vmatpush1.msra.mxu0 0.0
    %87 = vmatprep.subr.mxu0 0.0
    %88 = vmatpush1.msra.mxu0 0.0
    %89 = vmatprep.subr.mxu0 0.0
    %90 = vmatpush1.msra.mxu0 0.0
    %91 = vmatprep.subr.mxu0 0.0
    %92 = vmatpush1.msra.mxu0 0.0
    %93 = vmatprep.subr.mxu0 0.0
    %94 = vmatpush1.msra.mxu0 0.0
    %95 = vmatprep.subr.mxu0 0.0
    %96 = vmatpush1.msra.mxu0 0.0
    %97 = vmatprep.subr.mxu0 0.0
    %98 = vmatpush1.msra.mxu0 0.0
    %99 = vmatprep.subr.mxu0 0.0
    %100 = vmatpush1.msra.mxu0 0.0
    %101 = vmatprep.subr.mxu0 0.0
    %102 = vmatpush1.msra.mxu0 0.0
    %103 = vmatprep.mubr.f32.mxu0 0.0
    %104 = vmatmul.mubr.f32.gmra.mrb[0].mxu0 %v34
    %v105 = vpop.f32.mrb[0].mxu0
    %v106 = vadd.f32 %v30, %v105
    %v107 = vpop.f32.mrb[0].mxu0
    %108 = vmatprep.mubr.f32.mxu0 0.0
    %109 = vmatmul.mubr.f32.gmra.mrb[0].mxu0 %v37
    %v110 = vpop.f32.mrb[0].mxu0
    %v111 = vadd.f32 %v30, %v110
    %v112 = vpop.f32.mrb[0].mxu0
    %113 = vdwg.mxu0
    %v114 = vmul.f32 %v106, 0.70710677
    %v115 = vmul.f32 %v111, 0.70710677
    %v116 = vand.u32 2147483647, %v114
    %v117 = vand.u32 2147483647, %v115
    %v118 = vmul.f32 %v116, 0.3275911
    %v119 = vmul.f32 %v117, 0.3275911
    %v120 = vadd.f32 %v118, 1.0
    %v121 = vadd.f32 %v119, 1.0
    %v122 = vrcp.pop %v120
    %v123 = vmul.f32 1.0, %v122
    %v124 = vrcp.pop %v121
    %v125 = vmul.f32 1.0, %v124
    %v126 = vmul.f32 %v123, 1.0614054
    %v127 = vmul.f32 %v125, 1.0614054
    %v128 = vadd.f32 %v126, -1.4531521
    %v129 = vadd.f32 %v127, -1.4531521
    %v130 = vmul.f32 %v123, %v128
    %v131 = vmul.f32 %v125, %v129
    %v132 = vadd.f32 %v130, 1.4214138
    %v133 = vadd.f32 %v131, 1.4214138
    %v134 = vmul.f32 %v123, %v132
    %v135 = vmul.f32 %v125, %v133
    %v136 = vadd.f32 %v134, -0.28449672
    %v137 = vadd.f32 %v135, -0.28449672
    %v138 = vmul.f32 %v123, %v136
    %v139 = vmul.f32 %v125, %v137
    %v140 = vadd.f32 %v138, 0.2548296
    %v141 = vadd.f32 %v139, 0.2548296
    %v142 = vmul.f32 %v123, %v140
    %v143 = vmul.f32 %v125, %v141
    %v144 = vsub.f32 0.0, %v116
    %v145 = vsub.f32 0.0, %v117
    %v146 = vmul.f32 %v144, %v116
    %v147 = vmul.f32 %v145, %v117
    %v148 = vmul.f32 %v146, 1.442695
    %v149 = vpow.pop %v148
    %v150 = vmul.f32 %v147, 1.442695
    %v151 = vpow.pop %v150
    %v152 = vmul.f32 %v142, %v149
    %v153 = vmul.f32 %v143, %v151
    %v154 = vsub.f32 1.0, %v152
    %v155 = vsub.f32 1.0, %v153
    %vm156 = vcmp.ge.f32.partialorder %v114, 0.0
    %vm157 = vcmp.ge.f32.partialorder %v115, 0.0
    %v158 = vsub.f32 0.0, %v154
    %v159 = vsub.f32 0.0, %v155
    %v160 = vsel %vm156, %v154, %v158
    %v161 = vsel %vm157, %v155, %v159
    %v162 = vmul.f32 %v106, 0.5
    %v163 = vmul.f32 %v111, 0.5
    %v164 = vadd.f32 %v160, 1.0
    %v165 = vadd.f32 %v161, 1.0
    %v166 = vmul.f32 %v162, %v164
    %v167 = vmul.f32 %v163, %v165
    %v168 = vld [vmem:[%s3] sm:$0xff]
    %v169 = vld [vmem:[%s3 + $0x8] sm:$0xff]
    %v170 = vld [vmem:[%s3 + $0x10] sm:$0xff]
    %v171 = vld [vmem:[%s3 + $0x18] sm:$0xff]
    %v172 = vld [vmem:[%s4] sm:$0x1]
    %v174 = vlaneseq
    %v175 = vshrl.u32 %v174, 7
    %v176 = vsub.s32 0, %v175
    %v177 = vrot.slane %v172, %v176
    %vm179 = vcmask 261120
    %v181 = vsel %vm179, %v166, 0
    %v184 = vsel %vm179, %v167, 0
    %186 = vmatprep.subr.mxu0 0.0
    %187 = vmatpush1.msra.mxu0 %v168
    %188 = vmatprep.subr.mxu0 0.0
    %189 = vmatpush1.msra.mxu0 %v169
    %190 = vmatprep.subr.mxu0 0.0
    %191 = vmatpush1.msra.mxu0 %v170
    %192 = vmatprep.subr.mxu0 0.0
    %193 = vmatpush1.msra.mxu0 %v171
    %194 = vmatprep.subr.mxu0 0.0
    %195 = vmatpush1.msra.mxu0 0.0
    %196 = vmatprep.subr.mxu0 0.0
    %197 = vmatpush1.msra.mxu0 0.0
    %198 = vmatprep.subr.mxu0 0.0
    %199 = vmatpush1.msra.mxu0 0.0
    %200 = vmatprep.subr.mxu0 0.0
    %201 = vmatpush1.msra.mxu0 0.0
    %202 = vmatprep.subr.mxu0 0.0
    %203 = vmatpush1.msra.mxu0 0.0
    %204 = vmatprep.subr.mxu0 0.0
    %205 = vmatpush1.msra.mxu0 0.0
    %206 = vmatprep.subr.mxu0 0.0
    %207 = vmatpush1.msra.mxu0 0.0
    %208 = vmatprep.subr.mxu0 0.0
    %209 = vmatpush1.msra.mxu0 0.0
    %210 = vmatprep.subr.mxu0 0.0
    %211 = vmatpush1.msra.mxu0 0.0
    %212 = vmatprep.subr.mxu0 0.0
    %213 = vmatpush1.msra.mxu0 0.0
    %214 = vmatprep.subr.mxu0 0.0
    %215 = vmatpush1.msra.mxu0 0.0
    %216 = vmatprep.subr.mxu0 0.0
    %217 = vmatpush1.msra.mxu0 0.0
    %218 = vmatprep.subr.mxu0 0.0
    %219 = vmatpush1.msra.mxu0 0.0
    %220 = vmatprep.subr.mxu0 0.0
    %221 = vmatpush1.msra.mxu0 0.0
    %222 = vmatprep.subr.mxu0 0.0
    %223 = vmatpush1.msra.mxu0 0.0
    %224 = vmatprep.subr.mxu0 0.0
    %225 = vmatpush1.msra.mxu0 0.0
    %226 = vmatprep.subr.mxu0 0.0
    %227 = vmatpush1.msra.mxu0 0.0
    %228 = vmatprep.subr.mxu0 0.0
    %229 = vmatpush1.msra.mxu0 0.0
    %230 = vmatprep.subr.mxu0 0.0
    %231 = vmatpush1.msra.mxu0 0.0
    %232 = vmatprep.subr.mxu0 0.0
    %233 = vmatpush1.msra.mxu0 0.0
    %234 = vmatprep.subr.mxu0 0.0
    %235 = vmatpush1.msra.mxu0 0.0
    %236 = vmatprep.subr.mxu0 0.0
    %237 = vmatpush1.msra.mxu0 0.0
    %238 = vmatprep.subr.mxu0 0.0
    %239 = vmatpush1.msra.mxu0 0.0
    %240 = vmatprep.subr.mxu0 0.0
    %241 = vmatpush1.msra.mxu0 0.0
    %242 = vmatprep.subr.mxu0 0.0
    %243 = vmatpush1.msra.mxu0 0.0
    %244 = vmatprep.subr.mxu0 0.0
    %245 = vmatpush1.msra.mxu0 0.0
    %246 = vmatprep.subr.mxu0 0.0
    %247 = vmatpush1.msra.mxu0 0.0
    %248 = vmatprep.subr.mxu0 0.0
    %249 = vmatpush1.msra.mxu0 0.0
    %250 = vmatprep.mubr.f32.mxu0 0.0
    %251 = vmatmul.mubr.f32.gmra.mrb[0].mxu0 %v181
    %v252 = vpop.f32.mrb[0].mxu0
    %v253 = vadd.f32 %v177, %v252
    %v254 = vpop.f32.mrb[0].mxu0
    %255 = vmatprep.mubr.f32.mxu0 0.0
    %256 = vmatmul.mubr.f32.gmra.mrb[0].mxu0 %v184
    %v257 = vpop.f32.mrb[0].mxu0
    %v258 = vadd.f32 %v177, %v257
    %v259 = vpop.f32.mrb[0].mxu0
    %260 = vdwg.mxu0
    %261 = vst.msk [vmem:[#allocation2] sm:$0xff] %vm32, %v253
    %262 = vst.msk [vmem:[#allocation2 + $0x8] sm:$0xff] %vm32, %v258
    // Predicated region
    $region22: #{tpu_custom_call.1} parent=1 // pred_check
      _
    $region23: #{tpu_custom_call.1} parent=1 // pred_check_branch
      %264 = sbr.rel (0) target = $region25
    $region24: #{tpu_custom_call.1} parent=1 // pred_region
      %s266 = ssub.s32 256, 256
      %267 = vsyncadd [#allocation3], %s266
      %s268 = sshll.u32 [#allocation2], 4
      %s269 = int_to_ptr.vmem [resolvable:$true] %s268
      %274 = dma.vmem_to_hbm [thread:$0]  %s269, 256, %s5, [#allocation3], 128, 128, 8
    $region25: #{tpu_custom_call.1} parent=1 // pred_fallthru
      _
    // Predicated region
    $region26: #{tpu_custom_call.1} parent=1 // pred_check
      _
    $region27: #{tpu_custom_call.1} parent=1 // pred_check_branch
      %276 = sbr.rel (0) target = $region29
    $region28: #{tpu_custom_call.1} parent=1 // pred_region
      %277 = dma.done [#allocation3], 256
    $region29: #{tpu_custom_call.1} parent=1 // pred_fallthru
      _
    %278 = vsyncpa [#allocation3], 1

</llo_original>
